<compile_context>
chip_gen: v7x
topology: tpu7x:2x2x1
jax: 0.10.0
libtpu: 0.0.40
codegen_flags: <defaults>
</compile_context>

<pallas_src>
import jax
import jax.numpy as jnp
from jax.experimental import pallas as pl
from jax.experimental.pallas import tpu as pltpu


def _round_up(x, m):
    return ((x + m - 1) // m) * m


def _vmem_capacity_bytes():
    """Physical VMEM per TensorCore; conservative (v7x) fallback if unknown."""
    try:
        return int(pltpu.get_tpu_info().vmem_capacity_bytes)
    except Exception:
        return 64 << 20


def _choose_hidden_tiling(F, target, align=128):
    """Return (F_pad, tf) with tf lane-aligned (or full-extent) and tf | F_pad.

    The hidden dim is a reduction axis, so tiles must cover it exactly.  If no
    aligned divisor of F exists, F is padded (zero weight columns/rows, which
    is exact through ReLU and the second matmul).
    """
    if F <= target:
        return F, F                      # single f step, full-extent block
    t = (target // align) * align
    while t >= align:
        if F % t == 0:
            return F, t
        t -= align
    t = (target // align) * align        # no divisor: pad F up to multiple of t
    return _round_up(F, t), t


def _spec(block_shape, index_map, buffers=2):
    """BlockSpec, optionally single-buffered for constant/resident operands."""
    if buffers != 2 and hasattr(pl, "Buffered"):
        try:
            return pl.BlockSpec(block_shape, index_map,
                                pipeline_mode=pl.Buffered(buffers))
        except TypeError:
            pass  # older jax without pipeline_mode kwarg
    return pl.BlockSpec(block_shape, index_map)


def ffn_kernel(x_ref, w1_ref, b1_ref, w2_ref, b2_ref, o_ref):
    # x_ref : (tm, E) bf16     w1_ref: (E, tf) bf16    b1_ref: (1, tf) f32
    # w2_ref: (tf, E) bf16     b2_ref: (1, E)  f32
    # o_ref : (tm, E) f32  -- block index constant over f => VMEM-resident
    #                         accumulator for the whole hidden-dim reduction.
    f = pl.program_id(1)

    @pl.when(f == 0)
    def _init():
        o_ref[...] = jnp.broadcast_to(b2_ref[...], o_ref.shape).astype(o_ref.dtype)

    h = jnp.dot(x_ref[...], w1_ref[...], preferred_element_type=jnp.float32)
    h = jnp.maximum(h + b1_ref[...], 0.0)                 # f32 bias + ReLU
    o_ref[...] += jnp.dot(h.astype(w2_ref.dtype), w2_ref[...],
                          preferred_element_type=jnp.float32)


def feed_forward(x, w1, b1, w2, b2, *, matmul_dtype=jnp.bfloat16):
    """x: (B, S, E).  w1: (E, F), b1: (F,), w2: (F, E), b2: (E,).  -> (B, S, E)."""
    B, S, E = x.shape
    Ew, F = w1.shape
    assert Ew == E and w2.shape == (F, E) and b1.shape == (F,) and b2.shape == (E,)
    M = B * S
    w_bytes = jnp.dtype(matmul_dtype).itemsize

    # ---- generation-aware tile targets --------------------------------------
    cap = _vmem_capacity_bytes()
    budget = int(0.85 * cap)                    # never request more than physical
    big_vmem = cap >= (96 << 20)                # v5e/v6e (128 MiB) vs v7x (64 MiB)
    tm_target = 768 if big_vmem else 512
    tf_target = 1024 if big_vmem else 512

    F_pad, tf_eff = _choose_hidden_tiling(F, tf_target)
    nf = F_pad // tf_eff
    w_bufs = 1 if nf == 1 else 2                # fully resident weights -> 1 buffer

    # Row tile: full extent for small M (exempt from the 8-divisibility rule),
    # otherwise the generation target.
    tm_eff = M if M <= tm_target else tm_target
    x_bufs = 2

    def est(tm, xb):
        return (xb * tm * E * w_bytes                 # x tiles (bf16)
                + w_bufs * E * tf_eff * w_bytes       # W1
                + w_bufs * max(tf_eff, 128) * 4       # b1
                + w_bufs * tf_eff * E * w_bytes       # W2
                + max(E, 128) * 4                     # b2
                + 2 * tm * E * 4                      # out tiles (f32 acc, 2 bufs)
                + tm * tf_eff * 4                     # h (f32)
                + tm * tf_eff * w_bytes)              # h bf16 copy for 2nd dot

    # Shrink to fit the VMEM budget: x first (its block index is invariant over
    # the f axis, so double-buffering it is only a 1/nf effect), then tm.
    while est(tm_eff, x_bufs) > budget:
        if x_bufs == 2 and nf > 1:
            x_bufs = 1
        elif tm_eff > 128:
            tm_eff = max(128, ((tm_eff - 128) // 8) * 8)
        else:
            break

    nm = pl.cdiv(M, tm_eff)
    # Keep >= 2 row blocks when there is enough work so the "parallel" axis can
    # feed both TensorCores (megacore / v7x).
    if nm == 1 and M > 256:
        tm_eff = _round_up(pl.cdiv(M, 2), 8)
        nm = pl.cdiv(M, tm_eff)

    # ---- operand prep --------------------------------------------------------
    if F_pad != F:
        w1 = jnp.pad(w1, ((0, 0), (0, F_pad - F)))
        b1 = jnp.pad(b1, (0, F_pad - F))
        w2 = jnp.pad(w2, ((0, F_pad - F), (0, 0)))

    x2 = x.reshape(M, E).astype(matmul_dtype)         # bf16 once, in the wrapper
    w1c = w1.astype(matmul_dtype)
    w2c = w2.astype(matmul_dtype)
    b1_2d = b1.reshape(1, F_pad).astype(jnp.float32)
    b2_2d = b2.reshape(1, E).astype(jnp.float32)

    in_specs = [
        _spec((tm_eff, E), lambda i, f: (i, 0), x_bufs),        # x rows (bf16)
        _spec((E, tf_eff), lambda i, f: (0, f), w_bufs),        # W1
        _spec((1, tf_eff), lambda i, f: (0, f), w_bufs),        # b1
        _spec((tf_eff, E), lambda i, f: (f, 0), w_bufs),        # W2
        _spec((1, E), lambda i, f: (0, 0), 1),                  # b2 (constant)
    ]
    out_spec = pl.BlockSpec((tm_eff, E), lambda i, f: (i, 0))   # resident over f

    usage = est(tm_eff, x_bufs)
    vmem_limit = int(min(max(usage * 3 // 2 + (8 << 20), 32 << 20), budget))

    out = pl.pallas_call(
        ffn_kernel,
        out_shape=jax.ShapeDtypeStruct((M, E), jnp.float32),    # f32: safe to
        grid_spec=pltpu.PrefetchScalarGridSpec(                 # accumulate in o_ref
            num_scalar_prefetch=0,
            grid=(nm, nf),                          # rows parallel, hidden last
            in_specs=in_specs,
            out_specs=out_spec,
        ),
        compiler_params=pltpu.CompilerParams(
            dimension_semantics=("parallel", "arbitrary"),
            vmem_limit_bytes=vmem_limit,
        ),
    )(x2, w1c, b1_2d, w2c, b2_2d)

    return out.reshape(B, S, E).astype(x.dtype)


def init_params(key, embed_dim, ff_dim):
    """Deterministic init matching nn.Linear's U(-1/sqrt(fan_in), 1/sqrt(fan_in))."""
    k1, k2, k3, k4 = jax.random.split(key, 4)
    lim1 = 1.0 / jnp.sqrt(embed_dim)
    lim2 = 1.0 / jnp.sqrt(ff_dim)
    # PyTorch stores weight as (out, in); we use (in, out) so the kernel does x @ W.
    w1 = jax.random.uniform(k1, (embed_dim, ff_dim), jnp.float32, -lim1, lim1)
    b1 = jax.random.uniform(k2, (ff_dim,), jnp.float32, -lim1, lim1)
    w2 = jax.random.uniform(k3, (ff_dim, embed_dim), jnp.float32, -lim2, lim2)
    b2 = jax.random.uniform(k4, (embed_dim,), jnp.float32, -lim2, lim2)
    return w1, b1, w2, b2


if __name__ == "__main__":
    batch, seq, embed_dim, ff_dim = 2, 8, 32, 64

    key = jax.random.PRNGKey(0)
    kx, kp = jax.random.split(key)
    x = jax.random.normal(kx, (batch, seq, embed_dim), jnp.float32)
    w1, b1, w2, b2 = init_params(kp, embed_dim, ff_dim)

    out = feed_forward(x, w1, b1, w2, b2)
    out = jax.block_until_ready(out)
    assert out.shape == (batch, seq, embed_dim)

    # Reference matching the kernel's math (bf16 matmuls, f32 accumulation,
    # f32 bias + ReLU).  NOTE: bf16 matmuls deviate ~1e-2 relative from an
    # exact f32 PyTorch FeedForward; this is intentional (MXU dtype).
    bf16 = jnp.bfloat16
    h_ref = jnp.dot(x.astype(bf16), w1.astype(bf16),
                    preferred_element_type=jnp.float32) + b1
    h_ref = jnp.maximum(h_ref, 0.0)
    ref = jnp.dot(h_ref.astype(bf16), w2.astype(bf16),
                  preferred_element_type=jnp.float32) + b2
    assert jnp.allclose(out, ref, atol=2e-3, rtol=2e-3)

    # Loose sanity check against the exact f32 formula (bounds bf16 rounding).
    ref_f32 = jnp.maximum(x @ w1 + b1, 0.0) @ w2 + b2
    assert jnp.allclose(out, ref_f32, atol=1e-1, rtol=1e-1)

    print("KERNEL_OK")
</pallas_src>

<mosaic_0001>
module attributes {stable_mosaic.version = 11 : i64} {
  func.func @ffn_kernel(%arg0: i32, %arg1: i32, %arg2: memref<16x32xbf16, #tpu.memory_space<vmem>>, %arg3: memref<32x64xbf16, #tpu.memory_space<vmem>>, %arg4: memref<1x64xf32, #tpu.memory_space<vmem>>, %arg5: memref<64x32xbf16, #tpu.memory_space<vmem>>, %arg6: memref<1x32xf32, #tpu.memory_space<vmem>>, %arg7: memref<16x32xf32, #tpu.memory_space<vmem>>) attributes {dimension_semantics = [#tpu.dimension_semantics<parallel>, #tpu.dimension_semantics<arbitrary>], iteration_bounds = array<i64: 1, 1>, scalar_prefetch = 0 : i64, scratch_operands = 0 : i64, tpu.core_type = #tpu.core_type<tc>, window_params = [{transform_indices = @transform_0, window_bounds = array<i64: 16, 32>}, {pipeline_mode = #tpu.pipeline_mode<synchronous>, transform_indices = @transform_1, window_bounds = array<i64: 32, 64>}, {pipeline_mode = #tpu.pipeline_mode<synchronous>, transform_indices = @transform_2, window_bounds = array<i64: 1, 64>}, {pipeline_mode = #tpu.pipeline_mode<synchronous>, transform_indices = @transform_3, window_bounds = array<i64: 64, 32>}, {pipeline_mode = #tpu.pipeline_mode<synchronous>, transform_indices = @transform_4, window_bounds = array<i64: 1, 32>}, {transform_indices = @transform_5, window_bounds = array<i64: 16, 32>}]} {
    %c0_i32 = arith.constant 0 : i32
    %0 = arith.cmpi eq, %arg1, %c0_i32 : i32
    %1 = arith.extui %0 : i1 to i32
    %c0_i32_0 = arith.constant 0 : i32
    %2 = arith.cmpi ne, %1, %c0_i32_0 : i32
    scf.if %2 {
      %c0_14 = arith.constant 0 : index
      %c0_15 = arith.constant 0 : index
      %17 = vector.load %arg6[%c0_14, %c0_15] : memref<1x32xf32, #tpu.memory_space<vmem>>, vector<1x32xf32>
      %18 = vector.shape_cast %17 : vector<1x32xf32> to vector<1x32xf32>
      %19 = vector.broadcast %18 : vector<1x32xf32> to vector<16x32xf32>
      %c0_16 = arith.constant 0 : index
      %c0_17 = arith.constant 0 : index
      %20 = vector.load %arg7[%c0_16, %c0_17] : memref<16x32xf32, #tpu.memory_space<vmem>>, vector<16x32xf32>
      tpu.vector_store %arg7[%c0_16, %c0_17], %19 {strides = array<i32>} : memref<16x32xf32, #tpu.memory_space<vmem>>, vector<16x32xf32>,
    } else {
    }
    %c0 = arith.constant 0 : index
    %c0_1 = arith.constant 0 : index
    %3 = vector.load %arg2[%c0, %c0_1] : memref<16x32xbf16, #tpu.memory_space<vmem>>, vector<16x32xbf16>
    %c0_2 = arith.constant 0 : index
    %c0_3 = arith.constant 0 : index
    %4 = vector.load %arg3[%c0_2, %c0_3] : memref<32x64xbf16, #tpu.memory_space<vmem>>, vector<32x64xbf16>
    %cst = arith.constant dense<0.000000e+00> : vector<16x64xf32>
    %5 = tpu.matmul %3, %4, %cst {dimension_numbers = #tpu.dot_dimension_numbers<[1], [0], [0], [1], [0, 0, 1, 1], [], []>} : vector<16x32xbf16>, vector<32x64xbf16>, vector<16x64xf32> -> vector<16x64xf32>
    %c0_4 = arith.constant 0 : index
    %c0_5 = arith.constant 0 : index
    %6 = vector.load %arg4[%c0_4, %c0_5] : memref<1x64xf32, #tpu.memory_space<vmem>>, vector<1x64xf32>
    %7 = vector.broadcast %6 : vector<1x64xf32> to vector<16x64xf32>
    %8 = arith.addf %5, %7 : vector<16x64xf32>
    %cst_6 = arith.constant 0.000000e+00 : f32
    %9 = vector.broadcast %cst_6 : f32 to vector<16x64xf32>
    %10 = arith.maximumf %8, %9 : vector<16x64xf32>
    %c0_7 = arith.constant 0 : index
    %c0_8 = arith.constant 0 : index
    %11 = vector.load %arg7[%c0_7, %c0_8] : memref<16x32xf32, #tpu.memory_space<vmem>>, vector<16x32xf32>
    %12 = arith.truncf %10 : vector<16x64xf32> to vector<16x64xbf16>
    %c0_9 = arith.constant 0 : index
    %c0_10 = arith.constant 0 : index
    %13 = vector.load %arg5[%c0_9, %c0_10] : memref<64x32xbf16, #tpu.memory_space<vmem>>, vector<64x32xbf16>
    %cst_11 = arith.constant dense<0.000000e+00> : vector<16x32xf32>
    %14 = tpu.matmul %12, %13, %cst_11 {dimension_numbers = #tpu.dot_dimension_numbers<[1], [0], [0], [1], [0, 0, 1, 1], [], []>} : vector<16x64xbf16>, vector<64x32xbf16>, vector<16x32xf32> -> vector<16x32xf32>
    %15 = arith.addf %11, %14 : vector<16x32xf32>
    %c0_12 = arith.constant 0 : index
    %c0_13 = arith.constant 0 : index
    %16 = vector.load %arg7[%c0_12, %c0_13] : memref<16x32xf32, #tpu.memory_space<vmem>>, vector<16x32xf32>
    tpu.vector_store %arg7[%c0_12, %c0_13], %15 {strides = array<i32>} : memref<16x32xf32, #tpu.memory_space<vmem>>, vector<16x32xf32>,
    return
  }
  func.func @transform_0(%arg0: i32, %arg1: i32) -> (i32, i32) {
    %c0_i32 = arith.constant 0 : i32
    %c0_i32_0 = arith.constant 0 : i32
    return %arg0, %c0_i32 : i32, i32
  }
  func.func @transform_1(%arg0: i32, %arg1: i32) -> (i32, i32) {
    %c0_i32 = arith.constant 0 : i32
    %c0_i32_0 = arith.constant 0 : i32
    return %c0_i32, %arg1 : i32, i32
  }
  func.func @transform_2(%arg0: i32, %arg1: i32) -> (i32, i32) {
    %c0_i32 = arith.constant 0 : i32
    %c0_i32_0 = arith.constant 0 : i32
    return %c0_i32, %arg1 : i32, i32
  }
  func.func @transform_3(%arg0: i32, %arg1: i32) -> (i32, i32) {
    %c0_i32 = arith.constant 0 : i32
    %c0_i32_0 = arith.constant 0 : i32
    return %arg1, %c0_i32 : i32, i32
  }
  func.func @transform_4(%arg0: i32, %arg1: i32) -> (i32, i32) {
    %c0_i32 = arith.constant 0 : i32
    %c0_i32_0 = arith.constant 0 : i32
    %c0_i32_1 = arith.constant 0 : i32
    return %c0_i32, %c0_i32_0 : i32, i32
  }
  func.func @transform_5(%arg0: i32, %arg1: i32) -> (i32, i32) {
    %c0_i32 = arith.constant 0 : i32
    %c0_i32_0 = arith.constant 0 : i32
    return %arg0, %c0_i32 : i32, i32
  }
}

</mosaic_0001>

<llo_original>
// kernel: tpu_custom_call.1
$region0: #{tpu_custom_call.1}
  #allocation0 [shape = 'u32[]', space=smem, size = 0x4, offset = 0x4, fixed_abs, tag = 'smem constant byte address 0x4 - core index']
  #allocation1 [shape = 'u32[144,128]{1,0:T(1,128)}', space=vmem, size = 0x12000, scoped, tag = 'internal scratch']
  %s0 = inlined_call_operand.vmem [shape: bf16[16,32], index: 0, kind: input, shape index: {}]
  %s1 = inlined_call_operand.vmem [shape: bf16[32,64], index: 1, kind: input, shape index: {}]
  %s2 = inlined_call_operand.vmem [shape: f32[1,64], index: 2, kind: input, shape index: {}]
  %s3 = inlined_call_operand.vmem [shape: bf16[64,32], index: 3, kind: input, shape index: {}]
  %s4 = inlined_call_operand.vmem [shape: f32[1,32], index: 4, kind: input, shape index: {}]
  %s5 = inlined_call_operand.hbm [shape: f32[16,32], index: 5, kind: output, shape index: {}]
  %s6 = sld [smem:[#allocation0]]
  $region34: #{tpu_custom_call.1} parent=0
    _
  %s8 = ssub.s32 1, %s6
  %s9 = scalar_select 0, %s8, %s6
  $region1: #{tpu_custom_call.1} parent=0
    #allocation2 [shape = 'u8[8192]{0}', space=vmem, size = 0x2000, scoped, tag = 'output window, operand 0, single buffered']
    #allocation3 [shape = 's32[1]{0}', space=sflag, size = 0x4, scoped, tag = 'scoped memory for tpu_custom_call.1']
    %10 = vsyncpa [#allocation3], 0
    // Predicated region
    $region2: #{tpu_custom_call.1} parent=1 // pred_check
      _
    $region3: #{tpu_custom_call.1} parent=1 // pred_check_branch
      %12 = sbr.rel (0) target = $region5
    $region4: #{tpu_custom_call.1} parent=1 // pred_region
      _
    $region5: #{tpu_custom_call.1} parent=1 // pred_fallthru
      _
    // Predicated region
    $region6: #{tpu_custom_call.1} parent=1 // pred_check
      _
    $region7: #{tpu_custom_call.1} parent=1 // pred_check_branch
      %14 = sbr.rel (0) target = $region9
    $region8: #{tpu_custom_call.1} parent=1 // pred_region
      _
    $region9: #{tpu_custom_call.1} parent=1 // pred_fallthru
      _
    // Predicated region
    $region10: #{tpu_custom_call.1} parent=1 // pred_check
      _
    $region11: #{tpu_custom_call.1} parent=1 // pred_check_branch
      %16 = sbr.rel (0) target = $region13
    $region12: #{tpu_custom_call.1} parent=1 // pred_region
      _
    $region13: #{tpu_custom_call.1} parent=1 // pred_fallthru
      _
    // Predicated region
    $region14: #{tpu_custom_call.1} parent=1 // pred_check
      _
    $region15: #{tpu_custom_call.1} parent=1 // pred_check_branch
      %18 = sbr.rel (0) target = $region17
    $region16: #{tpu_custom_call.1} parent=1 // pred_region
      _
    $region17: #{tpu_custom_call.1} parent=1 // pred_fallthru
      _
    // Predicated region
    $region18: #{tpu_custom_call.1} parent=1 // pred_check
      _
    $region19: #{tpu_custom_call.1} parent=1 // pred_check_branch
      %20 = sbr.rel (0) target = $region21
    $region20: #{tpu_custom_call.1} parent=1 // pred_region
      _
    $region21: #{tpu_custom_call.1} parent=1 // pred_fallthru
      _
    %p22 = scmp.eq.s32.totalorder 0, 0
    // Predicated region
    $region22: #{tpu_custom_call.1} parent=1 // pred_check
      %p23 = pneg %p22
    $region23: #{tpu_custom_call.1} parent=1 // pred_check_branch
      %25 = sbr.rel (%p23) target = $region25
    $region24: #{tpu_custom_call.1} parent=1 // pred_region
      %v26 = vld [vmem:[%s4] sm:$0x1]
      %v28 = vlaneseq
      %v29 = vshrl.u32 %v28, 7
      %v30 = vsub.s32 0, %v29
      %v31 = vrot.slane %v26, %v30
      %vm33 = vcmask 261120
      %34 = vst.msk [vmem:[#allocation2] sm:$0xff] %vm33, %v31
      %35 = vst.msk [vmem:[#allocation2 + $0x8] sm:$0xff] %vm33, %v31
    $region25: #{tpu_custom_call.1} parent=1 // pred_fallthru
      _
    %v36 = vld [vmem:[%s0] sm:$0xf]
    %v37 = vld [vmem:[%s0 + $0x4] sm:$0xf]
    %v38 = vld [vmem:[%s1] sm:$0xf]
    %v39 = vld [vmem:[%s1 + $0x4] sm:$0xf]
    %v40 = vld [vmem:[%s1 + $0x8] sm:$0xf]
    %v41 = vld [vmem:[%s1 + $0xc] sm:$0xf]
    %v42 = vld [vmem:[%s2] sm:$0x1]
    %v44 = vlaneseq
    %v45 = vshrl.u32 %v44, 7
    %v46 = vsub.s32 0, %v45
    %v47 = vrot.slane %v42, %v46
    %v51 = vunpack.c.l.b16 %v36
    %v52 = vunpack.c.l.b16 %v37
    %v53 = vpack.c.b16 %v52, %v51
    %v58 = vunpack.c.l.b16 %v38
    %v59 = vunpack.c.l.b16 %v39
    %v60 = vunpack.c.l.b16 %v40
    %v61 = vunpack.c.l.b16 %v41
    %v62 = vpack.c.b16 %v59, %v58
    %v63 = vpack.c.b16 %v61, %v60
    %vm66 = vcmask 261120
    %v68 = vsel %vm66, %v53, 0
    %70 = vmatprep.subr.bf16.mxu0 0
    %71 = vmatpush1.bf16.msra.mxu0 %v62
    %72 = vmatprep.subr.bf16.mxu0 0
    %73 = vmatpush1.bf16.msra.mxu0 %v63
    %74 = vmatprep.subr.bf16.mxu0 0
    %75 = vmatpush1.bf16.msra.mxu0 0
    %76 = vmatprep.subr.bf16.mxu0 0
    %77 = vmatpush1.bf16.msra.mxu0 0
    %78 = vmatprep.subr.bf16.mxu0 0
    %79 = vmatpush1.bf16.msra.mxu0 0
    %80 = vmatprep.subr.bf16.mxu0 0
    %81 = vmatpush1.bf16.msra.mxu0 0
    %82 = vmatprep.subr.bf16.mxu0 0
    %83 = vmatpush1.bf16.msra.mxu0 0
    %84 = vmatprep.subr.bf16.mxu0 0
    %85 = vmatpush1.bf16.msra.mxu0 0
    %86 = vmatprep.subr.bf16.mxu0 0
    %87 = vmatpush1.bf16.msra.mxu0 0
    %88 = vmatprep.subr.bf16.mxu0 0
    %89 = vmatpush1.bf16.msra.mxu0 0
    %90 = vmatprep.subr.bf16.mxu0 0
    %91 = vmatpush1.bf16.msra.mxu0 0
    %92 = vmatprep.subr.bf16.mxu0 0
    %93 = vmatpush1.bf16.msra.mxu0 0
    %94 = vmatprep.subr.bf16.mxu0 0
    %95 = vmatpush1.bf16.msra.mxu0 0
    %96 = vmatprep.subr.bf16.mxu0 0
    %97 = vmatpush1.bf16.msra.mxu0 0
    %98 = vmatprep.subr.bf16.mxu0 0
    %99 = vmatpush1.bf16.msra.mxu0 0
    %100 = vmatprep.subr.bf16.mxu0 0
    %101 = vmatpush1.bf16.msra.mxu0 0
    %102 = vmatprep.mubr.bf16.mxu0 0
    %103 = vmatmul.mubr.bf16.gmra.mrb[0].mxu0 %v68
    %v104 = vpop.f32.mrb[0].mxu0
    %v105 = vadd.f32 %v47, %v104
    %v106 = vpop.f32.mrb[0].mxu0
    %v107 = vpop.f32.mrb[0].mxu0
    %v108 = vadd.f32 %v47, %v107
    %v109 = vpop.f32.mrb[0].mxu0
    %110 = vdwg.mxu0
    %v111 = vmax.f32 %v105, 0.0
    %v112 = vmax.f32 %v108, 0.0
    %v113 = vld [vmem:[#allocation2] sm:$0xff]
    %v114 = vld [vmem:[#allocation2 + $0x8] sm:$0xff]
    %v115 = vpack.c.bf16 %v112, %v111
    %v116 = vld [vmem:[%s3] sm:$0xf]
    %v117 = vld [vmem:[%s3 + $0x4] sm:$0xf]
    %v118 = vld [vmem:[%s3 + $0x8] sm:$0xf]
    %v119 = vld [vmem:[%s3 + $0xc] sm:$0xf]
    %v120 = vld [vmem:[%s3 + $0x10] sm:$0xf]
    %v121 = vld [vmem:[%s3 + $0x14] sm:$0xf]
    %v122 = vld [vmem:[%s3 + $0x18] sm:$0xf]
    %v123 = vld [vmem:[%s3 + $0x1c] sm:$0xf]
    %v132 = vunpack.c.l.b16 %v116
    %v133 = vunpack.c.l.b16 %v117
    %v134 = vunpack.c.l.b16 %v118
    %v135 = vunpack.c.l.b16 %v119
    %v136 = vunpack.c.l.b16 %v120
    %v137 = vunpack.c.l.b16 %v121
    %v138 = vunpack.c.l.b16 %v122
    %v139 = vunpack.c.l.b16 %v123
    %v140 = vpack.c.b16 %v133, %v132
    %v141 = vpack.c.b16 %v135, %v134
    %v142 = vpack.c.b16 %v137, %v136
    %v143 = vpack.c.b16 %v139, %v138
    %vm148 = vcmask 523264
    %v150 = vsel %vm148, %v115, 0
    %152 = vmatprep.subr.bf16.mxu0 0
    %153 = vmatpush1.bf16.msra.mxu0 %v140
    %154 = vmatprep.subr.bf16.mxu0 0
    %155 = vmatpush1.bf16.msra.mxu0 %v141
    %156 = vmatprep.subr.bf16.mxu0 0
    %157 = vmatpush1.bf16.msra.mxu0 %v142
    %158 = vmatprep.subr.bf16.mxu0 0
    %159 = vmatpush1.bf16.msra.mxu0 %v143
    %160 = vmatprep.subr.bf16.mxu0 0
    %161 = vmatpush1.bf16.msra.mxu0 0
    %162 = vmatprep.subr.bf16.mxu0 0
    %163 = vmatpush1.bf16.msra.mxu0 0
    %164 = vmatprep.subr.bf16.mxu0 0
    %165 = vmatpush1.bf16.msra.mxu0 0
    %166 = vmatprep.subr.bf16.mxu0 0
    %167 = vmatpush1.bf16.msra.mxu0 0
    %168 = vmatprep.subr.bf16.mxu0 0
    %169 = vmatpush1.bf16.msra.mxu0 0
    %170 = vmatprep.subr.bf16.mxu0 0
    %171 = vmatpush1.bf16.msra.mxu0 0
    %172 = vmatprep.subr.bf16.mxu0 0
    %173 = vmatpush1.bf16.msra.mxu0 0
    %174 = vmatprep.subr.bf16.mxu0 0
    %175 = vmatpush1.bf16.msra.mxu0 0
    %176 = vmatprep.subr.bf16.mxu0 0
    %177 = vmatpush1.bf16.msra.mxu0 0
    %178 = vmatprep.subr.bf16.mxu0 0
    %179 = vmatpush1.bf16.msra.mxu0 0
    %180 = vmatprep.subr.bf16.mxu0 0
    %181 = vmatpush1.bf16.msra.mxu0 0
    %182 = vmatprep.subr.bf16.mxu0 0
    %183 = vmatpush1.bf16.msra.mxu0 0
    %184 = vmatprep.mubr.bf16.mxu0 0
    %185 = vmatmul.mubr.bf16.gmra.mrb[0].mxu0 %v150
    %v186 = vpop.f32.mrb[0].mxu0
    %v187 = vadd.f32 0.0, %v186
    %v188 = vpop.f32.mrb[0].mxu0
    %v189 = vpop.f32.mrb[0].mxu0
    %v190 = vadd.f32 0.0, %v189
    %v191 = vpop.f32.mrb[0].mxu0
    %192 = vdwg.mxu0
    %v193 = vadd.f32 %v113, %v187
    %v194 = vadd.f32 %v114, %v190
    %195 = vst.msk [vmem:[#allocation2] sm:$0xff] %vm66, %v193
    %196 = vst.msk [vmem:[#allocation2 + $0x8] sm:$0xff] %vm66, %v194
    // Predicated region
    $region26: #{tpu_custom_call.1} parent=1 // pred_check
      _
    $region27: #{tpu_custom_call.1} parent=1 // pred_check_branch
      %198 = sbr.rel (0) target = $region29
    $region28: #{tpu_custom_call.1} parent=1 // pred_region
      %s200 = ssub.s32 256, 256
      %201 = vsyncadd [#allocation3], %s200
      %s202 = sshll.u32 [#allocation2], 4
      %s203 = int_to_ptr.vmem [resolvable:$true] %s202
      %208 = dma.vmem_to_hbm [thread:$0]  %s203, 256, %s5, [#allocation3], 128, 128, 8
    $region29: #{tpu_custom_call.1} parent=1 // pred_fallthru
      _
    // Predicated region
    $region30: #{tpu_custom_call.1} parent=1 // pred_check
      _
    $region31: #{tpu_custom_call.1} parent=1 // pred_check_branch
      %210 = sbr.rel (0) target = $region33
    $region32: #{tpu_custom_call.1} parent=1 // pred_region
      %211 = dma.done [#allocation3], 256
    $region33: #{tpu_custom_call.1} parent=1 // pred_fallthru
      _
    %212 = vsyncpa [#allocation3], 1

</llo_original>
